<compile_context>
chip_gen: v7x
topology: tpu7x:2x2x1
jax: 0.10.0
libtpu: 0.0.40
codegen_flags: <defaults>
</compile_context>

<pallas_src>
import jax
import jax.numpy as jnp
from jax.experimental import pallas as pl
from jax.experimental.pallas import tpu as pltpu


def _round_up(x, m):
    return (x + m - 1) // m * m


def _min_rows(dtype):
    # Minimum sublane granule for the second-to-last dim, per dtype packing.
    return {4: 8, 2: 16, 1: 32}.get(jnp.dtype(dtype).itemsize, 8)


def _resident_spec(shape):
    """Constant (weight/bias) block: same tile every grid step -> single buffer."""
    idx = lambda i: (0,) * len(shape)
    try:
        return pl.BlockSpec(shape, idx, pipeline_mode=pl.Buffered(1))
    except (AttributeError, TypeError):
        # Older jax without pipeline_mode: fall back to default buffering.
        return pl.BlockSpec(shape, idx)


def _vmem_capacity_bytes():
    try:
        return int(pltpu.get_tpu_info().vmem_capacity_bytes)
    except Exception:
        return 128 << 20  # v5e/v6e default


def mlp_kernel(x_ref, w1_ref, b1_ref, w2_ref, b2_ref, o_ref, h_ref):
    # Layer 1: x @ W1 on the MXU (f32 accumulation); bias + ReLU in f32 on the
    # VPU; store the activation to VMEM scratch in the compute dtype so the
    # h round trip is half-width when weights are bf16.
    h = jnp.dot(x_ref[...], w1_ref[...], preferred_element_type=jnp.float32)
    h = jnp.maximum(h + b1_ref[...], 0.0)
    h_ref[...] = h.astype(h_ref.dtype)
    # Layer 2: h @ W2 on the MXU (f32 accumulation) + bias.
    y = jnp.dot(h_ref[...], w2_ref[...], preferred_element_type=jnp.float32)
    o_ref[...] = (y + b2_ref[...]).astype(o_ref.dtype)


def mlp_forward(x, w1, b1, w2, b2, *, tile_b=None):
    B, D_in = x.shape
    D_out = w1.shape[1]
    assert w1.shape == (D_in, D_out)
    assert w2.shape == (D_out, D_out)

    # ---- batch tiling -------------------------------------------------------
    min_rows = _min_rows(x.dtype)
    if tile_b is None:
        max_tile = 512
        n_tiles = pl.cdiv(B, max_tile)
        # Split moderate batches into >=2 parallel tiles so both of v7x's
        # TensorCores get work (harmless on single-TC v5e/v6e).
        if n_tiles == 1 and B >= 256:
            n_tiles = 2
        tile_b = _round_up(pl.cdiv(B, n_tiles), min_rows)
        # Big tiles: match the 256-row MXU granule of v6e/v7x.
        if tile_b > 256:
            tile_b = _round_up(tile_b, 256)
    tile_b = max(min_rows, _round_up(int(tile_b), min_rows))
    tile_b = min(tile_b, _round_up(B, min_rows))  # never over-pad tiny batches

    grid = (pl.cdiv(B, tile_b),)  # ragged boundary handled by Pallas masking

    # Biases as (1, D_out) 2D VMEM tiles (broadcast along sublanes in-kernel).
    b1_2d = b1.reshape(1, D_out)
    b2_2d = b2.reshape(1, D_out)

    # ---- VMEM budget (with headroom), clamped to the chip's physical VMEM ---
    w_itemsize = jnp.dtype(w1.dtype).itemsize
    x_itemsize = jnp.dtype(x.dtype).itemsize
    h_itemsize = jnp.dtype(w2.dtype).itemsize
    resident = (D_in * D_out + D_out * D_out + 2 * D_out) * w_itemsize  # Buffered(1)
    streamed = 2 * tile_b * (D_in + D_out) * x_itemsize                  # x + out, 2x buf
    scratch = tile_b * D_out * h_itemsize
    vmem_need = resident + streamed + scratch
    vmem_cap = (_vmem_capacity_bytes() * 3) // 4   # ~48 MiB on v7x, ~96 MiB on v5e/v6e
    vmem_limit = int(min(max(vmem_need + (8 << 20), 32 << 20), vmem_cap))

    # ---- advisory cost hint for the XLA scheduler ---------------------------
    flops = 2 * B * D_out * (D_in + D_out)
    bytes_accessed = (B * D_in * x_itemsize                       # x read
                      + B * D_out * x_itemsize                    # out write
                      + (D_in * D_out + D_out * D_out + 2 * D_out) * w_itemsize)

    out = pl.pallas_call(
        mlp_kernel,
        out_shape=jax.ShapeDtypeStruct((B, D_out), x.dtype),
        grid_spec=pltpu.PrefetchScalarGridSpec(
            num_scalar_prefetch=0,
            grid=grid,
            in_specs=[
                pl.BlockSpec((tile_b, D_in), lambda i: (i, 0)),   # x tile (streamed)
                _resident_spec((D_in, D_out)),                    # W1 (resident, 1x buf)
                _resident_spec((1, D_out)),                       # b1
                _resident_spec((D_out, D_out)),                   # W2
                _resident_spec((1, D_out)),                       # b2
            ],
            out_specs=pl.BlockSpec((tile_b, D_out), lambda i: (i, 0)),
            scratch_shapes=[pltpu.VMEM((tile_b, D_out), w2.dtype)],
        ),
        compiler_params=pltpu.CompilerParams(
            dimension_semantics=("parallel",),
            vmem_limit_bytes=vmem_limit,
        ),
        cost_estimate=pl.CostEstimate(
            flops=flops, transcendentals=0, bytes_accessed=bytes_accessed),
    )(x, w1, b1_2d, w2, b2_2d)

    return out


def init_mlp_params(key, input_dim, output_dim, dtype=jnp.float32):
    # Mimic nn.Linear default init: U(-1/sqrt(fan_in), 1/sqrt(fan_in)).
    k1, k2, k3, k4 = jax.random.split(key, 4)
    bound1 = 1.0 / jnp.sqrt(input_dim)
    bound2 = 1.0 / jnp.sqrt(output_dim)
    w1 = jax.random.uniform(k1, (input_dim, output_dim), dtype, -bound1, bound1)
    b1 = jax.random.uniform(k2, (output_dim,), dtype, -bound1, bound1)
    w2 = jax.random.uniform(k3, (output_dim, output_dim), dtype, -bound2, bound2)
    b2 = jax.random.uniform(k4, (output_dim,), dtype, -bound2, bound2)
    return w1, b1, w2, b2


if __name__ == "__main__":
    key = jax.random.PRNGKey(0)
    kx, kp = jax.random.split(key)

    batch, input_dim, output_dim = 16, 128, 128
    x = jax.random.normal(kx, (batch, input_dim), jnp.float32)
    w1, b1, w2, b2 = init_mlp_params(kp, input_dim, output_dim)
    ref = jnp.maximum(x @ w1 + b1, 0.0) @ w2 + b2

    # 1) f32 path: single grid step, tight tolerance.
    out = jax.block_until_ready(mlp_forward(x, w1, b1, w2, b2))
    assert out.shape == (batch, output_dim)
    assert jnp.allclose(out, ref, atol=1e-5, rtol=1e-5)

    # 2) bf16 operand path (recommended on v6e/v7x): MXU runs bf16, h scratch
    #    is bf16, bias/ReLU stay f32; looser tolerance for bf16 rounding.
    out_bf16 = jax.block_until_ready(
        mlp_forward(x.astype(jnp.bfloat16), w1.astype(jnp.bfloat16), b1,
                    w2.astype(jnp.bfloat16), b2))
    assert out_bf16.dtype == jnp.bfloat16
    assert jnp.allclose(out_bf16.astype(jnp.float32), ref, atol=1e-1, rtol=1e-1)

    # 3) Ragged batch + multi-step grid; no wrapper-side padding (Pallas masks
    #    the boundary block, batch rows are independent).
    xr = jax.random.normal(kx, (37, input_dim), jnp.float32)
    out_r = jax.block_until_ready(mlp_forward(xr, w1, b1, w2, b2, tile_b=16))
    ref_r = jnp.maximum(xr @ w1 + b1, 0.0) @ w2 + b2
    assert out_r.shape == (37, output_dim)
    assert jnp.allclose(out_r, ref_r, atol=1e-5, rtol=1e-5)

    print("KERNEL_OK")
</pallas_src>

<mosaic_0001>
module attributes {stable_mosaic.version = 11 : i64} {
  func.func @mlp_kernel(%arg0: i32, %arg1: memref<16x128xf32, #tpu.memory_space<vmem>>, %arg2: memref<128x128xf32, #tpu.memory_space<vmem>>, %arg3: memref<1x128xf32, #tpu.memory_space<vmem>>, %arg4: memref<128x128xf32, #tpu.memory_space<vmem>>, %arg5: memref<1x128xf32, #tpu.memory_space<vmem>>, %arg6: memref<16x128xf32, #tpu.memory_space<vmem>>, %arg7: memref<16x128xf32, #tpu.memory_space<vmem>>) attributes {dimension_semantics = [#tpu.dimension_semantics<parallel>], iteration_bounds = array<i64: 1>, scalar_prefetch = 0 : i64, scratch_operands = 1 : i64, tpu.core_type = #tpu.core_type<tc>, window_params = [{transform_indices = @transform_0, window_bounds = array<i64: 16, 128>}, {pipeline_mode = #tpu.pipeline_mode<synchronous>, transform_indices = @transform_1, window_bounds = array<i64: 128, 128>}, {pipeline_mode = #tpu.pipeline_mode<synchronous>, transform_indices = @transform_2, window_bounds = array<i64: 1, 128>}, {pipeline_mode = #tpu.pipeline_mode<synchronous>, transform_indices = @transform_3, window_bounds = array<i64: 128, 128>}, {pipeline_mode = #tpu.pipeline_mode<synchronous>, transform_indices = @transform_4, window_bounds = array<i64: 1, 128>}, {transform_indices = @transform_5, window_bounds = array<i64: 16, 128>}]} {
    %c0 = arith.constant 0 : index
    %c0_0 = arith.constant 0 : index
    %0 = vector.load %arg1[%c0, %c0_0] : memref<16x128xf32, #tpu.memory_space<vmem>>, vector<16x128xf32>
    %c0_1 = arith.constant 0 : index
    %c0_2 = arith.constant 0 : index
    %1 = vector.load %arg2[%c0_1, %c0_2] : memref<128x128xf32, #tpu.memory_space<vmem>>, vector<128x128xf32>
    %cst = arith.constant dense<0.000000e+00> : vector<16x128xf32>
    %2 = tpu.matmul %0, %1, %cst {dimension_numbers = #tpu.dot_dimension_numbers<[1], [0], [0], [1], [0, 0, 1, 1], [], []>} : vector<16x128xf32>, vector<128x128xf32>, vector<16x128xf32> -> vector<16x128xf32>
    %c0_3 = arith.constant 0 : index
    %c0_4 = arith.constant 0 : index
    %3 = vector.load %arg3[%c0_3, %c0_4] : memref<1x128xf32, #tpu.memory_space<vmem>>, vector<1x128xf32>
    %4 = vector.broadcast %3 : vector<1x128xf32> to vector<16x128xf32>
    %5 = arith.addf %2, %4 : vector<16x128xf32>
    %cst_5 = arith.constant 0.000000e+00 : f32
    %6 = vector.broadcast %cst_5 : f32 to vector<16x128xf32>
    %7 = arith.maximumf %5, %6 : vector<16x128xf32>
    %c0_6 = arith.constant 0 : index
    %c0_7 = arith.constant 0 : index
    %8 = vector.load %arg7[%c0_6, %c0_7] : memref<16x128xf32, #tpu.memory_space<vmem>>, vector<16x128xf32>
    tpu.vector_store %arg7[%c0_6, %c0_7], %7 {strides = array<i32>} : memref<16x128xf32, #tpu.memory_space<vmem>>, vector<16x128xf32>,
    %c0_8 = arith.constant 0 : index
    %c0_9 = arith.constant 0 : index
    %9 = vector.load %arg7[%c0_8, %c0_9] : memref<16x128xf32, #tpu.memory_space<vmem>>, vector<16x128xf32>
    %c0_10 = arith.constant 0 : index
    %c0_11 = arith.constant 0 : index
    %10 = vector.load %arg4[%c0_10, %c0_11] : memref<128x128xf32, #tpu.memory_space<vmem>>, vector<128x128xf32>
    %cst_12 = arith.constant dense<0.000000e+00> : vector<16x128xf32>
    %11 = tpu.matmul %9, %10, %cst_12 {dimension_numbers = #tpu.dot_dimension_numbers<[1], [0], [0], [1], [0, 0, 1, 1], [], []>} : vector<16x128xf32>, vector<128x128xf32>, vector<16x128xf32> -> vector<16x128xf32>
    %c0_13 = arith.constant 0 : index
    %c0_14 = arith.constant 0 : index
    %12 = vector.load %arg5[%c0_13, %c0_14] : memref<1x128xf32, #tpu.memory_space<vmem>>, vector<1x128xf32>
    %13 = vector.broadcast %12 : vector<1x128xf32> to vector<16x128xf32>
    %14 = arith.addf %11, %13 : vector<16x128xf32>
    %c0_15 = arith.constant 0 : index
    %c0_16 = arith.constant 0 : index
    %15 = vector.load %arg6[%c0_15, %c0_16] : memref<16x128xf32, #tpu.memory_space<vmem>>, vector<16x128xf32>
    tpu.vector_store %arg6[%c0_15, %c0_16], %14 {strides = array<i32>} : memref<16x128xf32, #tpu.memory_space<vmem>>, vector<16x128xf32>,
    return
  }
  func.func @transform_0(%arg0: i32) -> (i32, i32) {
    %c0_i32 = arith.constant 0 : i32
    %c0_i32_0 = arith.constant 0 : i32
    return %arg0, %c0_i32 : i32, i32
  }
  func.func @transform_1(%arg0: i32) -> (i32, i32) {
    %c0_i32 = arith.constant 0 : i32
    %c0_i32_0 = arith.constant 0 : i32
    %c0_i32_1 = arith.constant 0 : i32
    return %c0_i32, %c0_i32_0 : i32, i32
  }
  func.func @transform_2(%arg0: i32) -> (i32, i32) {
    %c0_i32 = arith.constant 0 : i32
    %c0_i32_0 = arith.constant 0 : i32
    %c0_i32_1 = arith.constant 0 : i32
    return %c0_i32, %c0_i32_0 : i32, i32
  }
  func.func @transform_3(%arg0: i32) -> (i32, i32) {
    %c0_i32 = arith.constant 0 : i32
    %c0_i32_0 = arith.constant 0 : i32
    %c0_i32_1 = arith.constant 0 : i32
    return %c0_i32, %c0_i32_0 : i32, i32
  }
  func.func @transform_4(%arg0: i32) -> (i32, i32) {
    %c0_i32 = arith.constant 0 : i32
    %c0_i32_0 = arith.constant 0 : i32
    %c0_i32_1 = arith.constant 0 : i32
    return %c0_i32, %c0_i32_0 : i32, i32
  }
  func.func @transform_5(%arg0: i32) -> (i32, i32) {
    %c0_i32 = arith.constant 0 : i32
    %c0_i32_0 = arith.constant 0 : i32
    return %arg0, %c0_i32 : i32, i32
  }
}

</mosaic_0001>

<llo_original>
// kernel: tpu_custom_call.1
$region0: #{tpu_custom_call.1}
  #allocation0 [shape = 'u32[]', space=smem, size = 0x4, offset = 0x4, fixed_abs, tag = 'smem constant byte address 0x4 - core index']
  #allocation1 [shape = 'u32[144,128]{1,0:T(1,128)}', space=vmem, size = 0x12000, scoped, tag = 'internal scratch']
  #allocation2 [shape = 'f32[16,128]{1,0:T(8,128)}', space=vmem, size = 0x2000, scoped, tag = 'scratch operand']
  %s0 = inlined_call_operand.hbm [shape: f32[16,128], index: 0, kind: input, shape index: {}]
  %s1 = inlined_call_operand.hbm [shape: f32[128,128], index: 1, kind: input, shape index: {}]
  %s2 = inlined_call_operand.vmem [shape: f32[1,128], index: 2, kind: input, shape index: {}]
  %s3 = inlined_call_operand.hbm [shape: f32[128,128], index: 3, kind: input, shape index: {}]
  %s4 = inlined_call_operand.vmem [shape: f32[1,128], index: 4, kind: input, shape index: {}]
  %s5 = inlined_call_operand.hbm [shape: f32[16,128], index: 5, kind: output, shape index: {}]
  %s6 = sld [smem:[#allocation0]]
  $region42: #{tpu_custom_call.1} parent=0
    _
  %s8 = ssub.s32 1, %s6
  %s9 = scalar_select 0, %s8, %s6
  $region1: #{tpu_custom_call.1} parent=0
    #allocation3 [shape = 'u8[8192]{0}', space=vmem, size = 0x2000, scoped, tag = 'input window, operand 0, single buffered']
    #allocation4 [shape = 's32[1]{0}', space=sflag, size = 0x4, scoped, tag = 'scoped memory for tpu_custom_call.1']
    #allocation5 [shape = 's32[1]{0}', space=sflag, size = 0x4, scoped, tag = 'scoped memory for tpu_custom_call.1']
    #allocation6 [shape = 'u8[65536]{0}', space=vmem, size = 0x10000, scoped, tag = 'input window, operand 1, single buffered']
    #allocation7 [shape = 's32[1]{0}', space=sflag, size = 0x4, scoped, tag = 'scoped memory for tpu_custom_call.1']
    #allocation8 [shape = 'u8[65536]{0}', space=vmem, size = 0x10000, scoped, tag = 'input window, operand 3, single buffered']
    #allocation9 [shape = 'u8[8192]{0}', space=vmem, size = 0x2000, scoped, tag = 'output window, operand 0, single buffered']
    %10 = vsyncpa [#allocation4], 0
    %11 = vsyncpa [#allocation7], 0
    %12 = vsyncpa [#allocation5], 0
    // Predicated region
    $region2: #{tpu_custom_call.1} parent=1 // pred_check
      _
    $region3: #{tpu_custom_call.1} parent=1 // pred_check_branch
      %14 = sbr.rel (0) target = $region5
    $region4: #{tpu_custom_call.1} parent=1 // pred_region
      %s16 = ssub.s32 256, 256
      %17 = vsyncadd [#allocation4], %s16
      %s18 = sshll.u32 [#allocation3], 4
      %s19 = int_to_ptr.vmem [resolvable:$true] %s18
      %24 = dma.hbm_to_vmem [thread:$0]  %s0, 256, %s19, [#allocation4], 128, 128, 8
    $region5: #{tpu_custom_call.1} parent=1 // pred_fallthru
      _
    // Predicated region
    $region6: #{tpu_custom_call.1} parent=1 // pred_check
      _
    $region7: #{tpu_custom_call.1} parent=1 // pred_check_branch
      %26 = sbr.rel (0) target = $region9
    $region8: #{tpu_custom_call.1} parent=1 // pred_region
      %s28 = ssub.s32 2048, 2048
      %29 = vsyncadd [#allocation7], %s28
      %s30 = sshll.u32 [#allocation6], 4
      %s31 = int_to_ptr.vmem [resolvable:$true] %s30
      %36 = dma.hbm_to_vmem [thread:$0]  %s1, 2048, %s31, [#allocation7], 128, 128, 8
    $region9: #{tpu_custom_call.1} parent=1 // pred_fallthru
      _
    // Predicated region
    $region10: #{tpu_custom_call.1} parent=1 // pred_check
      _
    $region11: #{tpu_custom_call.1} parent=1 // pred_check_branch
      %38 = sbr.rel (0) target = $region13
    $region12: #{tpu_custom_call.1} parent=1 // pred_region
      _
    $region13: #{tpu_custom_call.1} parent=1 // pred_fallthru
      _
    // Predicated region
    $region14: #{tpu_custom_call.1} parent=1 // pred_check
      _
    $region15: #{tpu_custom_call.1} parent=1 // pred_check_branch
      %40 = sbr.rel (0) target = $region17
    $region16: #{tpu_custom_call.1} parent=1 // pred_region
      %s42 = ssub.s32 2048, 2048
      %43 = vsyncadd [#allocation7], %s42
      %s44 = sshll.u32 [#allocation8], 4
      %s45 = int_to_ptr.vmem [resolvable:$true] %s44
      %50 = dma.hbm_to_vmem [thread:$0]  %s3, 2048, %s45, [#allocation7], 128, 128, 8
    $region17: #{tpu_custom_call.1} parent=1 // pred_fallthru
      _
    // Predicated region
    $region18: #{tpu_custom_call.1} parent=1 // pred_check
      _
    $region19: #{tpu_custom_call.1} parent=1 // pred_check_branch
      %52 = sbr.rel (0) target = $region21
    $region20: #{tpu_custom_call.1} parent=1 // pred_region
      _
    $region21: #{tpu_custom_call.1} parent=1 // pred_fallthru
      _
    // Predicated region
    $region22: #{tpu_custom_call.1} parent=1 // pred_check
      _
    $region23: #{tpu_custom_call.1} parent=1 // pred_check_branch
      %54 = sbr.rel (0) target = $region25
    $region24: #{tpu_custom_call.1} parent=1 // pred_region
      %55 = dma.done [#allocation4], 256
    $region25: #{tpu_custom_call.1} parent=1 // pred_fallthru
      _
    // Predicated region
    $region26: #{tpu_custom_call.1} parent=1 // pred_check
      _
    $region27: #{tpu_custom_call.1} parent=1 // pred_check_branch
      %57 = sbr.rel (0) target = $region29
    $region28: #{tpu_custom_call.1} parent=1 // pred_region
      %58 = dma.done [#allocation7], 2048
    $region29: #{tpu_custom_call.1} parent=1 // pred_fallthru
      _
    // Predicated region
    $region30: #{tpu_custom_call.1} parent=1 // pred_check
      _
    $region31: #{tpu_custom_call.1} parent=1 // pred_check_branch
      %60 = sbr.rel (0) target = $region33
    $region32: #{tpu_custom_call.1} parent=1 // pred_region
      %61 = dma.done [#allocation7], 2048
    $region33: #{tpu_custom_call.1} parent=1 // pred_fallthru
      _
    %v62 = vld [vmem:[#allocation3] sm:$0xff]
    %v63 = vld [vmem:[#allocation3 + $0x8] sm:$0xff]
    %v64 = vld [vmem:[#allocation6] sm:$0xff]
    %v65 = vld [vmem:[#allocation6 + $0x8] sm:$0xff]
    %v66 = vld [vmem:[#allocation6 + $0x10] sm:$0xff]
    %v67 = vld [vmem:[#allocation6 + $0x18] sm:$0xff]
    %v68 = vld [vmem:[#allocation6 + $0x20] sm:$0xff]
    %v69 = vld [vmem:[#allocation6 + $0x28] sm:$0xff]
    %v70 = vld [vmem:[#allocation6 + $0x30] sm:$0xff]
    %v71 = vld [vmem:[#allocation6 + $0x38] sm:$0xff]
    %v72 = vld [vmem:[#allocation6 + $0x40] sm:$0xff]
    %v73 = vld [vmem:[#allocation6 + $0x48] sm:$0xff]
    %v74 = vld [vmem:[#allocation6 + $0x50] sm:$0xff]
    %v75 = vld [vmem:[#allocation6 + $0x58] sm:$0xff]
    %v76 = vld [vmem:[#allocation6 + $0x60] sm:$0xff]
    %v77 = vld [vmem:[#allocation6 + $0x68] sm:$0xff]
    %v78 = vld [vmem:[#allocation6 + $0x70] sm:$0xff]
    %v79 = vld [vmem:[#allocation6 + $0x78] sm:$0xff]
    %v80 = vld [vmem:[%s2] sm:$0x1]
    %v82 = vlaneseq
    %v83 = vshrl.u32 %v82, 7
    %v84 = vsub.s32 0, %v83
    %v85 = vrot.slane %v80, %v84
    %87 = vmatprep.subr.mxu0 0.0
    %88 = vmatpush1.msra.mxu0 %v64
    %89 = vmatprep.subr.mxu0 0.0
    %90 = vmatpush1.msra.mxu0 %v65
    %91 = vmatprep.subr.mxu0 0.0
    %92 = vmatpush1.msra.mxu0 %v66
    %93 = vmatprep.subr.mxu0 0.0
    %94 = vmatpush1.msra.mxu0 %v67
    %95 = vmatprep.subr.mxu0 0.0
    %96 = vmatpush1.msra.mxu0 %v68
    %97 = vmatprep.subr.mxu0 0.0
    %98 = vmatpush1.msra.mxu0 %v69
    %99 = vmatprep.subr.mxu0 0.0
    %100 = vmatpush1.msra.mxu0 %v70
    %101 = vmatprep.subr.mxu0 0.0
    %102 = vmatpush1.msra.mxu0 %v71
    %103 = vmatprep.subr.mxu0 0.0
    %104 = vmatpush1.msra.mxu0 %v72
    %105 = vmatprep.subr.mxu0 0.0
    %106 = vmatpush1.msra.mxu0 %v73
    %107 = vmatprep.subr.mxu0 0.0
    %108 = vmatpush1.msra.mxu0 %v74
    %109 = vmatprep.subr.mxu0 0.0
    %110 = vmatpush1.msra.mxu0 %v75
    %111 = vmatprep.subr.mxu0 0.0
    %112 = vmatpush1.msra.mxu0 %v76
    %113 = vmatprep.subr.mxu0 0.0
    %114 = vmatpush1.msra.mxu0 %v77
    %115 = vmatprep.subr.mxu0 0.0
    %116 = vmatpush1.msra.mxu0 %v78
    %117 = vmatprep.subr.mxu0 0.0
    %118 = vmatpush1.msra.mxu0 %v79
    %119 = vmatprep.subr.mxu0 0.0
    %120 = vmatpush1.msra.mxu0 0.0
    %121 = vmatprep.subr.mxu0 0.0
    %122 = vmatpush1.msra.mxu0 0.0
    %123 = vmatprep.subr.mxu0 0.0
    %124 = vmatpush1.msra.mxu0 0.0
    %125 = vmatprep.subr.mxu0 0.0
    %126 = vmatpush1.msra.mxu0 0.0
    %127 = vmatprep.subr.mxu0 0.0
    %128 = vmatpush1.msra.mxu0 0.0
    %129 = vmatprep.subr.mxu0 0.0
    %130 = vmatpush1.msra.mxu0 0.0
    %131 = vmatprep.subr.mxu0 0.0
    %132 = vmatpush1.msra.mxu0 0.0
    %133 = vmatprep.subr.mxu0 0.0
    %134 = vmatpush1.msra.mxu0 0.0
    %135 = vmatprep.subr.mxu0 0.0
    %136 = vmatpush1.msra.mxu0 0.0
    %137 = vmatprep.subr.mxu0 0.0
    %138 = vmatpush1.msra.mxu0 0.0
    %139 = vmatprep.subr.mxu0 0.0
    %140 = vmatpush1.msra.mxu0 0.0
    %141 = vmatprep.subr.mxu0 0.0
    %142 = vmatpush1.msra.mxu0 0.0
    %143 = vmatprep.subr.mxu0 0.0
    %144 = vmatpush1.msra.mxu0 0.0
    %145 = vmatprep.subr.mxu0 0.0
    %146 = vmatpush1.msra.mxu0 0.0
    %147 = vmatprep.subr.mxu0 0.0
    %148 = vmatpush1.msra.mxu0 0.0
    %149 = vmatprep.subr.mxu0 0.0
    %150 = vmatpush1.msra.mxu0 0.0
    %151 = vmatprep.mubr.f32.mxu0 0.0
    %152 = vmatmul.mubr.f32.gmra.mrb[0].mxu0 %v62
    %v153 = vpop.f32.mrb[0].mxu0
    %v154 = vadd.f32 %v85, %v153
    %v155 = vpop.f32.mrb[0].mxu0
    %156 = vmatprep.mubr.f32.mxu0 0.0
    %157 = vmatmul.mubr.f32.gmra.mrb[0].mxu0 %v63
    %v158 = vpop.f32.mrb[0].mxu0
    %v159 = vadd.f32 %v85, %v158
    %v160 = vpop.f32.mrb[0].mxu0
    %161 = vdwg.mxu0
    %v162 = vmax.f32 %v154, 0.0
    %v163 = vmax.f32 %v159, 0.0
    %164 = vst [vmem:[#allocation2] sm:$0xff] %v162
    %165 = vst [vmem:[#allocation2 + $0x8] sm:$0xff] %v163
    %v166 = vld [vmem:[#allocation2] sm:$0xff]
    %v167 = vld [vmem:[#allocation2 + $0x8] sm:$0xff]
    %v168 = vld [vmem:[#allocation8] sm:$0xff]
    %v169 = vld [vmem:[#allocation8 + $0x8] sm:$0xff]
    %v170 = vld [vmem:[#allocation8 + $0x10] sm:$0xff]
    %v171 = vld [vmem:[#allocation8 + $0x18] sm:$0xff]
    %v172 = vld [vmem:[#allocation8 + $0x20] sm:$0xff]
    %v173 = vld [vmem:[#allocation8 + $0x28] sm:$0xff]
    %v174 = vld [vmem:[#allocation8 + $0x30] sm:$0xff]
    %v175 = vld [vmem:[#allocation8 + $0x38] sm:$0xff]
    %v176 = vld [vmem:[#allocation8 + $0x40] sm:$0xff]
    %v177 = vld [vmem:[#allocation8 + $0x48] sm:$0xff]
    %v178 = vld [vmem:[#allocation8 + $0x50] sm:$0xff]
    %v179 = vld [vmem:[#allocation8 + $0x58] sm:$0xff]
    %v180 = vld [vmem:[#allocation8 + $0x60] sm:$0xff]
    %v181 = vld [vmem:[#allocation8 + $0x68] sm:$0xff]
    %v182 = vld [vmem:[#allocation8 + $0x70] sm:$0xff]
    %v183 = vld [vmem:[#allocation8 + $0x78] sm:$0xff]
    %v184 = vld [vmem:[%s4] sm:$0x1]
    %v186 = vlaneseq
    %v187 = vshrl.u32 %v186, 7
    %v188 = vsub.s32 0, %v187
    %v189 = vrot.slane %v184, %v188
    %191 = vmatprep.subr.mxu0 0.0
    %192 = vmatpush1.msra.mxu0 %v168
    %193 = vmatprep.subr.mxu0 0.0
    %194 = vmatpush1.msra.mxu0 %v169
    %195 = vmatprep.subr.mxu0 0.0
    %196 = vmatpush1.msra.mxu0 %v170
    %197 = vmatprep.subr.mxu0 0.0
    %198 = vmatpush1.msra.mxu0 %v171
    %199 = vmatprep.subr.mxu0 0.0
    %200 = vmatpush1.msra.mxu0 %v172
    %201 = vmatprep.subr.mxu0 0.0
    %202 = vmatpush1.msra.mxu0 %v173
    %203 = vmatprep.subr.mxu0 0.0
    %204 = vmatpush1.msra.mxu0 %v174
    %205 = vmatprep.subr.mxu0 0.0
    %206 = vmatpush1.msra.mxu0 %v175
    %207 = vmatprep.subr.mxu0 0.0
    %208 = vmatpush1.msra.mxu0 %v176
    %209 = vmatprep.subr.mxu0 0.0
    %210 = vmatpush1.msra.mxu0 %v177
    %211 = vmatprep.subr.mxu0 0.0
    %212 = vmatpush1.msra.mxu0 %v178
    %213 = vmatprep.subr.mxu0 0.0
    %214 = vmatpush1.msra.mxu0 %v179
    %215 = vmatprep.subr.mxu0 0.0
    %216 = vmatpush1.msra.mxu0 %v180
    %217 = vmatprep.subr.mxu0 0.0
    %218 = vmatpush1.msra.mxu0 %v181
    %219 = vmatprep.subr.mxu0 0.0
    %220 = vmatpush1.msra.mxu0 %v182
    %221 = vmatprep.subr.mxu0 0.0
    %222 = vmatpush1.msra.mxu0 %v183
    %223 = vmatprep.subr.mxu0 0.0
    %224 = vmatpush1.msra.mxu0 0.0
    %225 = vmatprep.subr.mxu0 0.0
    %226 = vmatpush1.msra.mxu0 0.0
    %227 = vmatprep.subr.mxu0 0.0
    %228 = vmatpush1.msra.mxu0 0.0
    %229 = vmatprep.subr.mxu0 0.0
    %230 = vmatpush1.msra.mxu0 0.0
    %231 = vmatprep.subr.mxu0 0.0
    %232 = vmatpush1.msra.mxu0 0.0
    %233 = vmatprep.subr.mxu0 0.0
    %234 = vmatpush1.msra.mxu0 0.0
    %235 = vmatprep.subr.mxu0 0.0
    %236 = vmatpush1.msra.mxu0 0.0
    %237 = vmatprep.subr.mxu0 0.0
    %238 = vmatpush1.msra.mxu0 0.0
    %239 = vmatprep.subr.mxu0 0.0
    %240 = vmatpush1.msra.mxu0 0.0
    %241 = vmatprep.subr.mxu0 0.0
    %242 = vmatpush1.msra.mxu0 0.0
    %243 = vmatprep.subr.mxu0 0.0
    %244 = vmatpush1.msra.mxu0 0.0
    %245 = vmatprep.subr.mxu0 0.0
    %246 = vmatpush1.msra.mxu0 0.0
    %247 = vmatprep.subr.mxu0 0.0
    %248 = vmatpush1.msra.mxu0 0.0
    %249 = vmatprep.subr.mxu0 0.0
    %250 = vmatpush1.msra.mxu0 0.0
    %251 = vmatprep.subr.mxu0 0.0
    %252 = vmatpush1.msra.mxu0 0.0
    %253 = vmatprep.subr.mxu0 0.0
    %254 = vmatpush1.msra.mxu0 0.0
    %255 = vmatprep.mubr.f32.mxu0 0.0
    %256 = vmatmul.mubr.f32.gmra.mrb[0].mxu0 %v166
    %v257 = vpop.f32.mrb[0].mxu0
    %v258 = vadd.f32 %v189, %v257
    %v259 = vpop.f32.mrb[0].mxu0
    %260 = vmatprep.mubr.f32.mxu0 0.0
    %261 = vmatmul.mubr.f32.gmra.mrb[0].mxu0 %v167
    %v262 = vpop.f32.mrb[0].mxu0
    %v263 = vadd.f32 %v189, %v262
    %v264 = vpop.f32.mrb[0].mxu0
    %265 = vdwg.mxu0
    %266 = vst [vmem:[#allocation9] sm:$0xff] %v258
    %267 = vst [vmem:[#allocation9 + $0x8] sm:$0xff] %v263
    // Predicated region
    $region34: #{tpu_custom_call.1} parent=1 // pred_check
      _
    $region35: #{tpu_custom_call.1} parent=1 // pred_check_branch
      %269 = sbr.rel (0) target = $region37
    $region36: #{tpu_custom_call.1} parent=1 // pred_region
      %s271 = ssub.s32 256, 256
      %272 = vsyncadd [#allocation5], %s271
      %s273 = sshll.u32 [#allocation9], 4
      %s274 = int_to_ptr.vmem [resolvable:$true] %s273
      %279 = dma.vmem_to_hbm [thread:$0]  %s274, 256, %s5, [#allocation5], 128, 128, 8
    $region37: #{tpu_custom_call.1} parent=1 // pred_fallthru
      _
    // Predicated region
    $region38: #{tpu_custom_call.1} parent=1 // pred_check
      _
    $region39: #{tpu_custom_call.1} parent=1 // pred_check_branch
      %281 = sbr.rel (0) target = $region41
    $region40: #{tpu_custom_call.1} parent=1 // pred_region
      %282 = dma.done [#allocation5], 256
    $region41: #{tpu_custom_call.1} parent=1 // pred_fallthru
      _
    %283 = vsyncpa [#allocation4], 1
    %284 = vsyncpa [#allocation7], 1
    %285 = vsyncpa [#allocation5], 1

</llo_original>
